<compile_context>
chip_gen: v7x
topology: tpu7x:2x2x1
jax: 0.10.0
libtpu: 0.0.40
codegen_flags: <defaults>
</compile_context>

<pallas_src>
import functools

import jax
import jax.numpy as jnp
from jax import lax
from jax.experimental import pallas as pl
from jax.experimental.pallas import tpu as pltpu


def _round_up(x, m):
    return ((x + m - 1) // m) * m


def _max_agg_kernel(idx_ref, val_ref, out_ref, has_ref, *, n_rows, ragged):
    """One (d_tile, n_tile) grid step of the segment max.

    idx_ref: [TN, 1]  int32  group id per row
    val_ref: [TN, TD]        values tile (streamed; ragged tail may be garbage)
    out_ref: [S, TD]         resident across the N axis (accumulator + output)
    has_ref: [1, S]   f32    scratch: 1.0 where the group has >=1 row
    """
    ni = pl.program_id(1)
    n_last = pl.num_programs(1) - 1
    tn, td = val_ref.shape
    s = out_ref.shape[0]

    @pl.when(ni == 0)
    def _init():
        out_ref[...] = jnp.full_like(out_ref, -jnp.inf)
        has_ref[...] = jnp.zeros_like(has_ref)

    vals = val_ref[...]                       # [TN, TD]
    idx = idx_ref[...]                        # [TN, 1]

    if ragged:
        # values is NOT padded on the host; rows past the true end get an
        # out-of-range group id so they never contribute (garbage-safe).
        row = ni * tn + lax.broadcasted_iota(jnp.int32, (tn, 1), 0)
        idx = jnp.where(row < n_rows, idx, s)

    # Hoisted lane broadcast of the index: once per tile, not once per group.
    idx_b = jnp.broadcast_to(idx, (tn, td))

    # Per-group masked maxima stacked into [S, TD]; ONE dense read-modify-write
    # of the resident output block instead of S masked single-row stores.
    # TODO(synk): for large `size`, switch to sorted rows + scalar-prefetched
    # group offsets -> O(N*D) work instead of the O(S*N*D) unrolled loop.
    rows = [
        jnp.max(jnp.where(idx_b == g, vals, -jnp.inf), axis=0, keepdims=True)
        for g in range(s)
    ]
    tile_max = jnp.concatenate(rows, axis=0)                      # [S, TD]
    out_ref[...] = jnp.maximum(out_ref[...], tile_max)

    # One-shot "group has any row" flags: single lane-iota compare + one reduce.
    hit = idx == lax.broadcasted_iota(jnp.int32, (tn, s), 1)      # [TN, S]
    has_ref[...] = jnp.maximum(
        has_ref[...], jnp.max(hit.astype(jnp.float32), axis=0, keepdims=True))

    @pl.when(ni == n_last)
    def _finalize():
        # Empty groups -> 0 with exact has-any semantics (preserves legitimate
        # -inf maxima).  Turn the [1, S] lane flags into an [S, 1] column via a
        # diagonal select (no reshape/transpose needed).
        flags = has_ref[...]                                       # [1, S]
        ri = lax.broadcasted_iota(jnp.int32, (s, s), 0)
        ci = lax.broadcasted_iota(jnp.int32, (s, s), 1)
        fcol = jnp.max(
            jnp.where(ri == ci, jnp.broadcast_to(flags, (s, s)), 0.0),
            axis=1, keepdims=True)                                 # [S, 1]
        out_ref[...] = jnp.where(fcol > 0.0, out_ref[...], jnp.zeros_like(out_ref))


def max_aggregation(values, index, size, *, tile_n=1024):
    """values: [N, D] float, index: [N] int, size: int -> [size, D] float."""
    n, d = values.shape
    itemsize = jnp.dtype(values.dtype).itemsize

    # Feature tiling: multiples of 128 when possible (prefer >=2 tiles so the
    # parallel axis can feed both v7x TensorCores); otherwise one full-D tile
    # (no host-side feature padding).
    if d % 128 == 0:
        td = 128
        for cand in (512, 256):
            if d % cand == 0 and d // cand >= 2:
                td = cand
                break
    else:
        td = d

    # Row tiling: large blocks to amortize per-step overhead, shrunk only if a
    # double-buffered values block would not fit comfortably in VMEM.
    tn = min(tile_n, _round_up(n, 8))
    while tn > 8 and 2 * tn * td * itemsize > (8 << 20):
        tn = _round_up(tn // 2, 8)

    num_d = pl.cdiv(d, td)
    num_n = pl.cdiv(n, tn)
    ragged = (n % tn) != 0

    idx2d = index.astype(jnp.int32).reshape(n, 1)    # cheap; values untouched

    kernel = functools.partial(_max_agg_kernel, n_rows=n, ragged=ragged)

    vmem_est = (2 * tn * td * itemsize                               # values (dbl buf)
                + 2 * tn * 128 * 4                                   # index blocks
                + 2 * _round_up(size, 8) * _round_up(td, 128) * itemsize   # out
                + 8 * _round_up(size, 128) * 4)                      # has scratch
    vmem_limit = int(min(64 << 20, max(16 << 20, 2 * vmem_est + (4 << 20))))

    out = pl.pallas_call(
        kernel,
        out_shape=jax.ShapeDtypeStruct((size, d), values.dtype),
        grid_spec=pltpu.PrefetchScalarGridSpec(
            num_scalar_prefetch=0,
            grid=(num_d, num_n),        # (parallel D tiles, N reduction tiles)
            in_specs=[
                pl.BlockSpec((tn, 1), lambda di, ni: (ni, 0)),
                pl.BlockSpec((tn, td), lambda di, ni: (ni, di)),
            ],
            out_specs=pl.BlockSpec((size, td), lambda di, ni: (0, di)),
            scratch_shapes=[pltpu.VMEM((1, size), jnp.float32)],
        ),
        compiler_params=pltpu.CompilerParams(
            dimension_semantics=("parallel", "arbitrary"),
            vmem_limit_bytes=vmem_limit,
        ),
        cost_estimate=pl.CostEstimate(
            flops=2 * size * n * d,
            transcendentals=0,
            bytes_accessed=n * d * itemsize + 4 * n + size * d * itemsize,
        ),
    )(idx2d, values)

    return out


class AggregationLayersPallas:
    """Mirror of AggregationLayers with layer_name='Max' (default)."""

    def __init__(self, layer_name="Max", key_dim=None, value_dim=None,
                 query_dim=None, embedding_layer_num=0, output_dim=None,
                 homogeneous_flag=False):
        assert "Attention" in layer_name or output_dim is None or output_dim == value_dim
        assert layer_name == "Max", "only the Max aggregation path is implemented"
        self.layer_name = layer_name
        self.homogeneous_flag = homogeneous_flag

    def forward(self, keys, values, query, index, size):
        # Non-attention path: keys / query are ignored.
        return max_aggregation(values, index, size)

    __call__ = forward


def _reference(values, index, size):
    mask = index[:, None] == jnp.arange(size)[None, :]                 # [N, S]
    masked = jnp.where(mask[:, :, None], values[:, None, :], -jnp.inf)
    ref = jnp.max(masked, axis=0)                                      # [S, D]
    return jnp.where(jnp.any(mask, axis=0)[:, None], ref, 0.0)


if __name__ == "__main__":
    key = jax.random.PRNGKey(0)
    k_vals, k_idx, k_keys, k_query, k_vals2, k_idx2 = jax.random.split(key, 6)

    # Case 1: the module-shaped call (keys / query present but unused).
    N, D, S = 64, 32, 8
    values = jax.random.normal(k_vals, (N, D), dtype=jnp.float32)
    index = jax.random.randint(k_idx, (N,), 0, S, dtype=jnp.int32)
    keys = jax.random.normal(k_keys, (N, D), dtype=jnp.float32)
    query = jax.random.normal(k_query, (S, D), dtype=jnp.float32)

    layer = AggregationLayersPallas(layer_name="Max", key_dim=D, value_dim=D,
                                    query_dim=D, embedding_layer_num=0,
                                    output_dim=None, homogeneous_flag=False)
    out1 = jax.block_until_ready(layer(keys, values, query, index, S))
    ref1 = _reference(values, index, S)
    assert out1.shape == (S, D)
    assert jnp.allclose(out1, ref1, atol=1e-6), "mismatch vs reference (case 1)"

    # Case 2: ragged row count, multi D-tile, and guaranteed-empty groups.
    N2, D2, S2 = 50, 256, 13
    values2 = jax.random.normal(k_vals2, (N2, D2), dtype=jnp.float32)
    index2 = jax.random.randint(k_idx2, (N2,), 0, S2 - 2, dtype=jnp.int32)
    out2 = jax.block_until_ready(max_aggregation(values2, index2, S2))
    ref2 = _reference(values2, index2, S2)
    assert out2.shape == (S2, D2)
    assert jnp.allclose(out2, ref2, atol=1e-6), "mismatch vs reference (case 2)"

    print("KERNEL_OK")
</pallas_src>

<mosaic_0001>
module attributes {stable_mosaic.version = 11 : i64} {
  func.func @_max_agg_kernel(%arg0: i32, %arg1: i32, %arg2: memref<64x1xi32, #tpu.memory_space<vmem>>, %arg3: memref<64x32xf32, #tpu.memory_space<vmem>>, %arg4: memref<8x32xf32, #tpu.memory_space<vmem>>, %arg5: memref<1x8xf32, #tpu.memory_space<vmem>>) attributes {dimension_semantics = [#tpu.dimension_semantics<parallel>, #tpu.dimension_semantics<arbitrary>], iteration_bounds = array<i64: 1, 1>, scalar_prefetch = 0 : i64, scratch_operands = 1 : i64, tpu.core_type = #tpu.core_type<tc>, window_params = [{transform_indices = @transform_0, window_bounds = array<i64: 64, 1>}, {transform_indices = @transform_1, window_bounds = array<i64: 64, 32>}, {transform_indices = @transform_2, window_bounds = array<i64: 8, 32>}]} {
    %c0_i32 = arith.constant 0 : i32
    %0 = arith.cmpi eq, %arg1, %c0_i32 : i32
    %1 = arith.extui %0 : i1 to i32
    %c0_i32_0 = arith.constant 0 : i32
    %2 = arith.cmpi ne, %1, %c0_i32_0 : i32
    scf.if %2 {
      %cst_31 = arith.constant 0xFF800000 : f32
      %72 = vector.broadcast %cst_31 : f32 to vector<8x32xf32>
      %c0_32 = arith.constant 0 : index
      %c0_33 = arith.constant 0 : index
      %73 = vector.load %arg4[%c0_32, %c0_33] : memref<8x32xf32, #tpu.memory_space<vmem>>, vector<8x32xf32>
      tpu.vector_store %arg4[%c0_32, %c0_33], %72 {strides = array<i32>} : memref<8x32xf32, #tpu.memory_space<vmem>>, vector<8x32xf32>,
      %cst_34 = arith.constant 0.000000e+00 : f32
      %74 = vector.broadcast %cst_34 : f32 to vector<1x8xf32>
      %c0_35 = arith.constant 0 : index
      %c0_36 = arith.constant 0 : index
      %75 = vector.load %arg5[%c0_35, %c0_36] : memref<1x8xf32, #tpu.memory_space<vmem>>, vector<1x8xf32>
      tpu.vector_store %arg5[%c0_35, %c0_36], %74 {strides = array<i32>} : memref<1x8xf32, #tpu.memory_space<vmem>>, vector<1x8xf32>,
    } else {
    }
    %c0 = arith.constant 0 : index
    %c0_1 = arith.constant 0 : index
    %3 = vector.load %arg3[%c0, %c0_1] : memref<64x32xf32, #tpu.memory_space<vmem>>, vector<64x32xf32>
    %c0_2 = arith.constant 0 : index
    %c0_3 = arith.constant 0 : index
    %4 = vector.load %arg2[%c0_2, %c0_3] : memref<64x1xi32, #tpu.memory_space<vmem>>, vector<64x1xi32>
    %5 = vector.shape_cast %4 : vector<64x1xi32> to vector<64x1xi32>
    %6 = vector.broadcast %5 : vector<64x1xi32> to vector<64x32xi32>
    %c0_i32_4 = arith.constant 0 : i32
    %7 = vector.broadcast %c0_i32_4 : i32 to vector<64x32xi32>
    %8 = arith.cmpi eq, %6, %7 : vector<64x32xi32>
    %cst = arith.constant 0xFF800000 : f32
    %9 = vector.broadcast %cst : f32 to vector<64x32xf32>
    %10 = arith.select %8, %3, %9 : vector<64x32xi1>, vector<64x32xf32>
    %cst_5 = arith.constant dense<0xFF800000> : vector<32xf32>
    %11 = vector.multi_reduction <maximumf>, %10, %cst_5 [0] : vector<64x32xf32> to vector<32xf32>
    %12 = vector.shape_cast %11 : vector<32xf32> to vector<1x32xf32>
    %c1_i32 = arith.constant 1 : i32
    %13 = vector.broadcast %c1_i32 : i32 to vector<64x32xi32>
    %14 = arith.cmpi eq, %6, %13 : vector<64x32xi32>
    %cst_6 = arith.constant 0xFF800000 : f32
    %15 = vector.broadcast %cst_6 : f32 to vector<64x32xf32>
    %16 = arith.select %14, %3, %15 : vector<64x32xi1>, vector<64x32xf32>
    %cst_7 = arith.constant dense<0xFF800000> : vector<32xf32>
    %17 = vector.multi_reduction <maximumf>, %16, %cst_7 [0] : vector<64x32xf32> to vector<32xf32>
    %18 = vector.shape_cast %17 : vector<32xf32> to vector<1x32xf32>
    %c2_i32 = arith.constant 2 : i32
    %19 = vector.broadcast %c2_i32 : i32 to vector<64x32xi32>
    %20 = arith.cmpi eq, %6, %19 : vector<64x32xi32>
    %cst_8 = arith.constant 0xFF800000 : f32
    %21 = vector.broadcast %cst_8 : f32 to vector<64x32xf32>
    %22 = arith.select %20, %3, %21 : vector<64x32xi1>, vector<64x32xf32>
    %cst_9 = arith.constant dense<0xFF800000> : vector<32xf32>
    %23 = vector.multi_reduction <maximumf>, %22, %cst_9 [0] : vector<64x32xf32> to vector<32xf32>
    %24 = vector.shape_cast %23 : vector<32xf32> to vector<1x32xf32>
    %c3_i32 = arith.constant 3 : i32
    %25 = vector.broadcast %c3_i32 : i32 to vector<64x32xi32>
    %26 = arith.cmpi eq, %6, %25 : vector<64x32xi32>
    %cst_10 = arith.constant 0xFF800000 : f32
    %27 = vector.broadcast %cst_10 : f32 to vector<64x32xf32>
    %28 = arith.select %26, %3, %27 : vector<64x32xi1>, vector<64x32xf32>
    %cst_11 = arith.constant dense<0xFF800000> : vector<32xf32>
    %29 = vector.multi_reduction <maximumf>, %28, %cst_11 [0] : vector<64x32xf32> to vector<32xf32>
    %30 = vector.shape_cast %29 : vector<32xf32> to vector<1x32xf32>
    %c4_i32 = arith.constant 4 : i32
    %31 = vector.broadcast %c4_i32 : i32 to vector<64x32xi32>
    %32 = arith.cmpi eq, %6, %31 : vector<64x32xi32>
    %cst_12 = arith.constant 0xFF800000 : f32
    %33 = vector.broadcast %cst_12 : f32 to vector<64x32xf32>
    %34 = arith.select %32, %3, %33 : vector<64x32xi1>, vector<64x32xf32>
    %cst_13 = arith.constant dense<0xFF800000> : vector<32xf32>
    %35 = vector.multi_reduction <maximumf>, %34, %cst_13 [0] : vector<64x32xf32> to vector<32xf32>
    %36 = vector.shape_cast %35 : vector<32xf32> to vector<1x32xf32>
    %c5_i32 = arith.constant 5 : i32
    %37 = vector.broadcast %c5_i32 : i32 to vector<64x32xi32>
    %38 = arith.cmpi eq, %6, %37 : vector<64x32xi32>
    %cst_14 = arith.constant 0xFF800000 : f32
    %39 = vector.broadcast %cst_14 : f32 to vector<64x32xf32>
    %40 = arith.select %38, %3, %39 : vector<64x32xi1>, vector<64x32xf32>
    %cst_15 = arith.constant dense<0xFF800000> : vector<32xf32>
    %41 = vector.multi_reduction <maximumf>, %40, %cst_15 [0] : vector<64x32xf32> to vector<32xf32>
    %42 = vector.shape_cast %41 : vector<32xf32> to vector<1x32xf32>
    %c6_i32 = arith.constant 6 : i32
    %43 = vector.broadcast %c6_i32 : i32 to vector<64x32xi32>
    %44 = arith.cmpi eq, %6, %43 : vector<64x32xi32>
    %cst_16 = arith.constant 0xFF800000 : f32
    %45 = vector.broadcast %cst_16 : f32 to vector<64x32xf32>
    %46 = arith.select %44, %3, %45 : vector<64x32xi1>, vector<64x32xf32>
    %cst_17 = arith.constant dense<0xFF800000> : vector<32xf32>
    %47 = vector.multi_reduction <maximumf>, %46, %cst_17 [0] : vector<64x32xf32> to vector<32xf32>
    %48 = vector.shape_cast %47 : vector<32xf32> to vector<1x32xf32>
    %c7_i32 = arith.constant 7 : i32
    %49 = vector.broadcast %c7_i32 : i32 to vector<64x32xi32>
    %50 = arith.cmpi eq, %6, %49 : vector<64x32xi32>
    %cst_18 = arith.constant 0xFF800000 : f32
    %51 = vector.broadcast %cst_18 : f32 to vector<64x32xf32>
    %52 = arith.select %50, %3, %51 : vector<64x32xi1>, vector<64x32xf32>
    %cst_19 = arith.constant dense<0xFF800000> : vector<32xf32>
    %53 = vector.multi_reduction <maximumf>, %52, %cst_19 [0] : vector<64x32xf32> to vector<32xf32>
    %54 = vector.shape_cast %53 : vector<32xf32> to vector<1x32xf32>
    %55 = tpu.concatenate %12, %18, %24, %30, %36, %42, %48, %54 in 0 : vector<1x32xf32>, vector<1x32xf32>, vector<1x32xf32>, vector<1x32xf32>, vector<1x32xf32>, vector<1x32xf32>, vector<1x32xf32>, vector<1x32xf32> -> vector<8x32xf32>
    %c0_20 = arith.constant 0 : index
    %c0_21 = arith.constant 0 : index
    %56 = vector.load %arg4[%c0_20, %c0_21] : memref<8x32xf32, #tpu.memory_space<vmem>>, vector<8x32xf32>
    %57 = arith.maximumf %56, %55 : vector<8x32xf32>
    %c0_22 = arith.constant 0 : index
    %c0_23 = arith.constant 0 : index
    %58 = vector.load %arg4[%c0_22, %c0_23] : memref<8x32xf32, #tpu.memory_space<vmem>>, vector<8x32xf32>
    tpu.vector_store %arg4[%c0_22, %c0_23], %57 {strides = array<i32>} : memref<8x32xf32, #tpu.memory_space<vmem>>, vector<8x32xf32>,
    %59 = tpu.iota {dimensions = array<i32: 1>} : vector<64x8xi32>
    %60 = vector.broadcast %4 : vector<64x1xi32> to vector<64x8xi32>
    %61 = arith.cmpi eq, %60, %59 : vector<64x8xi32>
    %c0_24 = arith.constant 0 : index
    %c0_25 = arith.constant 0 : index
    %62 = vector.load %arg5[%c0_24, %c0_25] : memref<1x8xf32, #tpu.memory_space<vmem>>, vector<1x8xf32>
    %63 = arith.extui %61 : vector<64x8xi1> to vector<64x8xi32>
    %64 = arith.sitofp %63 : vector<64x8xi32> to vector<64x8xf32>
    %cst_26 = arith.constant dense<0xFF800000> : vector<8xf32>
    %65 = vector.multi_reduction <maximumf>, %64, %cst_26 [0] : vector<64x8xf32> to vector<8xf32>
    %66 = vector.shape_cast %65 : vector<8xf32> to vector<1x8xf32>
    %67 = arith.maximumf %62, %66 : vector<1x8xf32>
    %c0_27 = arith.constant 0 : index
    %c0_28 = arith.constant 0 : index
    %68 = vector.load %arg5[%c0_27, %c0_28] : memref<1x8xf32, #tpu.memory_space<vmem>>, vector<1x8xf32>
    tpu.vector_store %arg5[%c0_27, %c0_28], %67 {strides = array<i32>} : memref<1x8xf32, #tpu.memory_space<vmem>>, vector<1x8xf32>,
    %c0_i32_29 = arith.constant 0 : i32
    %69 = arith.cmpi eq, %arg1, %c0_i32_29 : i32
    %70 = arith.extui %69 : i1 to i32
    %c0_i32_30 = arith.constant 0 : i32
    %71 = arith.cmpi ne, %70, %c0_i32_30 : i32
    scf.if %71 {
      %c0_31 = arith.constant 0 : index
      %c0_32 = arith.constant 0 : index
      %72 = vector.load %arg5[%c0_31, %c0_32] : memref<1x8xf32, #tpu.memory_space<vmem>>, vector<1x8xf32>
      %73 = tpu.iota {dimensions = array<i32: 0>} : vector<8x8xi32>
      %74 = tpu.iota {dimensions = array<i32: 1>} : vector<8x8xi32>
      %75 = arith.cmpi eq, %73, %74 : vector<8x8xi32>
      %76 = vector.shape_cast %72 : vector<1x8xf32> to vector<1x8xf32>
      %77 = vector.broadcast %76 : vector<1x8xf32> to vector<8x8xf32>
      %cst_33 = arith.constant 0.000000e+00 : f32
      %78 = vector.broadcast %cst_33 : f32 to vector<8x8xf32>
      %79 = arith.select %75, %77, %78 : vector<8x8xi1>, vector<8x8xf32>
      %cst_34 = arith.constant dense<0xFF800000> : vector<8xf32>
      %80 = vector.multi_reduction <maximumf>, %79, %cst_34 [1] : vector<8x8xf32> to vector<8xf32>
      %81 = vector.shape_cast %80 : vector<8xf32> to vector<8x1xf32>
      %cst_35 = arith.constant 0.000000e+00 : f32
      %82 = vector.broadcast %cst_35 : f32 to vector<8x1xf32>
      %83 = arith.cmpf ogt, %81, %82 : vector<8x1xf32>
      %c0_36 = arith.constant 0 : index
      %c0_37 = arith.constant 0 : index
      %84 = vector.load %arg4[%c0_36, %c0_37] : memref<8x32xf32, #tpu.memory_space<vmem>>, vector<8x32xf32>
      %cst_38 = arith.constant 0.000000e+00 : f32
      %85 = vector.broadcast %cst_38 : f32 to vector<8x32xf32>
      %86 = vector.shape_cast %83 : vector<8x1xi1> to vector<8x1xi1>
      %87 = vector.broadcast %86 : vector<8x1xi1> to vector<8x32xi1>
      %88 = arith.select %87, %84, %85 : vector<8x32xi1>, vector<8x32xf32>
      %c0_39 = arith.constant 0 : index
      %c0_40 = arith.constant 0 : index
      %89 = vector.load %arg4[%c0_39, %c0_40] : memref<8x32xf32, #tpu.memory_space<vmem>>, vector<8x32xf32>
      tpu.vector_store %arg4[%c0_39, %c0_40], %88 {strides = array<i32>} : memref<8x32xf32, #tpu.memory_space<vmem>>, vector<8x32xf32>,
    } else {
    }
    return
  }
  func.func @transform_0(%arg0: i32, %arg1: i32) -> (i32, i32) {
    %c0_i32 = arith.constant 0 : i32
    %c0_i32_0 = arith.constant 0 : i32
    return %arg1, %c0_i32 : i32, i32
  }
  func.func @transform_1(%arg0: i32, %arg1: i32) -> (i32, i32) {
    %c0_i32 = arith.constant 0 : i32
    return %arg1, %arg0 : i32, i32
  }
  func.func @transform_2(%arg0: i32, %arg1: i32) -> (i32, i32) {
    %c0_i32 = arith.constant 0 : i32
    %c0_i32_0 = arith.constant 0 : i32
    return %c0_i32, %arg0 : i32, i32
  }
}

</mosaic_0001>

<llo_original>
// kernel: tpu_custom_call.1
$region0: #{tpu_custom_call.1}
  #allocation0 [shape = 'u32[]', space=smem, size = 0x4, offset = 0x4, fixed_abs, tag = 'smem constant byte address 0x4 - core index']
  #allocation1 [shape = 'u32[144,128]{1,0:T(1,128)}', space=vmem, size = 0x12000, scoped, tag = 'internal scratch']
  #allocation2 [shape = 'f32[1,8]{1,0:T(1,128)}', space=vmem, size = 0x200, scoped, tag = 'scratch operand']
  %s0 = inlined_call_operand.vmem [shape: s32[64,1], index: 0, kind: input, shape index: {}]
  %s1 = inlined_call_operand.vmem [shape: f32[64,32], index: 1, kind: input, shape index: {}]
  %s2 = inlined_call_operand.hbm [shape: f32[8,32], index: 2, kind: output, shape index: {}]
  %s3 = sld [smem:[#allocation0]]
  $region26: #{tpu_custom_call.1} parent=0
    _
  %s5 = ssub.s32 1, %s3
  %s6 = scalar_select 0, %s5, %s3
  $region1: #{tpu_custom_call.1} parent=0
    #allocation3 [shape = 'u8[4096]{0}', space=vmem, size = 0x1000, scoped, tag = 'output window, operand 0, single buffered']
    #allocation4 [shape = 's32[1]{0}', space=sflag, size = 0x4, scoped, tag = 'scoped memory for tpu_custom_call.1']
    %7 = vsyncpa [#allocation4], 0
    // Predicated region
    $region2: #{tpu_custom_call.1} parent=1 // pred_check
      _
    $region3: #{tpu_custom_call.1} parent=1 // pred_check_branch
      %9 = sbr.rel (0) target = $region5
    $region4: #{tpu_custom_call.1} parent=1 // pred_region
      _
    $region5: #{tpu_custom_call.1} parent=1 // pred_fallthru
      _
    // Predicated region
    $region6: #{tpu_custom_call.1} parent=1 // pred_check
      _
    $region7: #{tpu_custom_call.1} parent=1 // pred_check_branch
      %11 = sbr.rel (0) target = $region9
    $region8: #{tpu_custom_call.1} parent=1 // pred_region
      _
    $region9: #{tpu_custom_call.1} parent=1 // pred_fallthru
      _
    %p12 = scmp.eq.s32.totalorder 0, 0
    // Predicated region
    $region10: #{tpu_custom_call.1} parent=1 // pred_check
      %p13 = pneg %p12
    $region11: #{tpu_custom_call.1} parent=1 // pred_check_branch
      %15 = sbr.rel (%p13) target = $region13
    $region12: #{tpu_custom_call.1} parent=1 // pred_region
      %vm16 = vcmask 261120
      %17 = vst.msk [vmem:[#allocation3] sm:$0xff] %vm16, -inf
      %vm18 = vcmask 57344
      %19 = vst.msk [vmem:[#allocation2] sm:$0x1] %vm18, 0.0
    $region13: #{tpu_custom_call.1} parent=1 // pred_fallthru
      _
    %v20 = vld [vmem:[%s1] sm:$0xff]
    %v21 = vld [vmem:[%s1 + $0x8] sm:$0xff]
    %v22 = vld [vmem:[%s1 + $0x10] sm:$0xff]
    %v23 = vld [vmem:[%s1 + $0x18] sm:$0xff]
    %v24 = vld [vmem:[%s1 + $0x20] sm:$0xff]
    %v25 = vld [vmem:[%s1 + $0x28] sm:$0xff]
    %v26 = vld [vmem:[%s1 + $0x30] sm:$0xff]
    %v27 = vld [vmem:[%s1 + $0x38] sm:$0xff]
    %v28 = vld [vmem:[%s0] sm:$0xff]
    %v29 = vld [vmem:[%s0 + $0x8] sm:$0xff]
    %v30 = vld [vmem:[%s0 + $0x10] sm:$0xff]
    %v31 = vld [vmem:[%s0 + $0x18] sm:$0xff]
    %v32 = vld [vmem:[%s0 + $0x20] sm:$0xff]
    %v33 = vld [vmem:[%s0 + $0x28] sm:$0xff]
    %v34 = vld [vmem:[%s0 + $0x30] sm:$0xff]
    %v35 = vld [vmem:[%s0 + $0x38] sm:$0xff]
    %36 = vset.pattern.permute.xlu0 0
    %37 = vperm.xlu0 %36, %v28
    %v38 = vpop.permute.xlu0 %37
    %39 = vset.pattern.permute.xlu0 0
    %40 = vperm.xlu0 %39, %v29
    %v41 = vpop.permute.xlu0 %40
    %42 = vset.pattern.permute.xlu0 0
    %43 = vperm.xlu0 %42, %v30
    %v44 = vpop.permute.xlu0 %43
    %45 = vset.pattern.permute.xlu0 0
    %46 = vperm.xlu0 %45, %v31
    %v47 = vpop.permute.xlu0 %46
    %48 = vset.pattern.permute.xlu0 0
    %49 = vperm.xlu0 %48, %v32
    %v50 = vpop.permute.xlu0 %49
    %51 = vset.pattern.permute.xlu0 0
    %52 = vperm.xlu0 %51, %v33
    %v53 = vpop.permute.xlu0 %52
    %54 = vset.pattern.permute.xlu0 0
    %55 = vperm.xlu0 %54, %v34
    %v56 = vpop.permute.xlu0 %55
    %57 = vset.pattern.permute.xlu0 0
    %58 = vperm.xlu0 %57, %v35
    %v59 = vpop.permute.xlu0 %58
    %vm60 = vcmp.eq.s32.totalorder %v38, 0
    %vm61 = vcmp.eq.s32.totalorder %v41, 0
    %vm62 = vcmp.eq.s32.totalorder %v44, 0
    %vm63 = vcmp.eq.s32.totalorder %v47, 0
    %vm64 = vcmp.eq.s32.totalorder %v50, 0
    %vm65 = vcmp.eq.s32.totalorder %v53, 0
    %vm66 = vcmp.eq.s32.totalorder %v56, 0
    %vm67 = vcmp.eq.s32.totalorder %v59, 0
    %v68 = vsel %vm60, %v20, -inf
    %v69 = vsel %vm61, %v21, -inf
    %v70 = vsel %vm62, %v22, -inf
    %v71 = vsel %vm63, %v23, -inf
    %v72 = vsel %vm64, %v24, -inf
    %v73 = vsel %vm65, %v25, -inf
    %v74 = vsel %vm66, %v26, -inf
    %v75 = vsel %vm67, %v27, -inf
    %vm76 = vcmask 261120
    %v77 = vsel %vm76, %v68, -inf
    %v78 = vsel %vm76, %v69, -inf
    %v79 = vsel %vm76, %v70, -inf
    %v80 = vsel %vm76, %v71, -inf
    %v81 = vsel %vm76, %v72, -inf
    %v82 = vmax.f32 %v77, %v81
    %v83 = vsel %vm76, %v73, -inf
    %v84 = vmax.f32 %v78, %v83
    %v85 = vsel %vm76, %v74, -inf
    %v86 = vmax.f32 %v79, %v85
    %v87 = vsel %vm76, %v75, -inf
    %v88 = vmax.f32 %v80, %v87
    %v89 = vmax.f32 %v82, %v84
    %v90 = vmax.f32 %v86, %v88
    %v91 = vmax.f32 %v89, %v90
    %v92 = vrot.slane %v91, 4
    %v93 = vmax.f32 %v91, %v92
    %v94 = vrot.slane %v93, 2
    %v95 = vmax.f32 %v93, %v94
    %v96 = vrot.slane %v95, 1
    %v97 = vmax.f32 %v95, %v96
    %vm98 = vcmp.eq.s32.totalorder %v38, 1
    %vm99 = vcmp.eq.s32.totalorder %v41, 1
    %vm100 = vcmp.eq.s32.totalorder %v44, 1
    %vm101 = vcmp.eq.s32.totalorder %v47, 1
    %vm102 = vcmp.eq.s32.totalorder %v50, 1
    %vm103 = vcmp.eq.s32.totalorder %v53, 1
    %vm104 = vcmp.eq.s32.totalorder %v56, 1
    %vm105 = vcmp.eq.s32.totalorder %v59, 1
    %v106 = vsel %vm98, %v20, -inf
    %v107 = vsel %vm99, %v21, -inf
    %v108 = vsel %vm100, %v22, -inf
    %v109 = vsel %vm101, %v23, -inf
    %v110 = vsel %vm102, %v24, -inf
    %v111 = vsel %vm103, %v25, -inf
    %v112 = vsel %vm104, %v26, -inf
    %v113 = vsel %vm105, %v27, -inf
    %v114 = vsel %vm76, %v106, -inf
    %v115 = vsel %vm76, %v107, -inf
    %v116 = vsel %vm76, %v108, -inf
    %v117 = vsel %vm76, %v109, -inf
    %v118 = vsel %vm76, %v110, -inf
    %v119 = vmax.f32 %v114, %v118
    %v120 = vsel %vm76, %v111, -inf
    %v121 = vmax.f32 %v115, %v120
    %v122 = vsel %vm76, %v112, -inf
    %v123 = vmax.f32 %v116, %v122
    %v124 = vsel %vm76, %v113, -inf
    %v125 = vmax.f32 %v117, %v124
    %v126 = vmax.f32 %v119, %v121
    %v127 = vmax.f32 %v123, %v125
    %v128 = vmax.f32 %v126, %v127
    %v129 = vrot.slane %v128, 4
    %v130 = vmax.f32 %v128, %v129
    %v131 = vrot.slane %v130, 2
    %v132 = vmax.f32 %v130, %v131
    %v133 = vrot.slane %v132, 1
    %v134 = vmax.f32 %v132, %v133
    %vm135 = vcmp.eq.s32.totalorder %v38, 2
    %vm136 = vcmp.eq.s32.totalorder %v41, 2
    %vm137 = vcmp.eq.s32.totalorder %v44, 2
    %vm138 = vcmp.eq.s32.totalorder %v47, 2
    %vm139 = vcmp.eq.s32.totalorder %v50, 2
    %vm140 = vcmp.eq.s32.totalorder %v53, 2
    %vm141 = vcmp.eq.s32.totalorder %v56, 2
    %vm142 = vcmp.eq.s32.totalorder %v59, 2
    %v143 = vsel %vm135, %v20, -inf
    %v144 = vsel %vm136, %v21, -inf
    %v145 = vsel %vm137, %v22, -inf
    %v146 = vsel %vm138, %v23, -inf
    %v147 = vsel %vm139, %v24, -inf
    %v148 = vsel %vm140, %v25, -inf
    %v149 = vsel %vm141, %v26, -inf
    %v150 = vsel %vm142, %v27, -inf
    %v151 = vsel %vm76, %v143, -inf
    %v152 = vsel %vm76, %v144, -inf
    %v153 = vsel %vm76, %v145, -inf
    %v154 = vsel %vm76, %v146, -inf
    %v155 = vsel %vm76, %v147, -inf
    %v156 = vmax.f32 %v151, %v155
    %v157 = vsel %vm76, %v148, -inf
    %v158 = vmax.f32 %v152, %v157
    %v159 = vsel %vm76, %v149, -inf
    %v160 = vmax.f32 %v153, %v159
    %v161 = vsel %vm76, %v150, -inf
    %v162 = vmax.f32 %v154, %v161
    %v163 = vmax.f32 %v156, %v158
    %v164 = vmax.f32 %v160, %v162
    %v165 = vmax.f32 %v163, %v164
    %v166 = vrot.slane %v165, 4
    %v167 = vmax.f32 %v165, %v166
    %v168 = vrot.slane %v167, 2
    %v169 = vmax.f32 %v167, %v168
    %v170 = vrot.slane %v169, 1
    %v171 = vmax.f32 %v169, %v170
    %vm172 = vcmp.eq.s32.totalorder %v38, 3
    %vm173 = vcmp.eq.s32.totalorder %v41, 3
    %vm174 = vcmp.eq.s32.totalorder %v44, 3
    %vm175 = vcmp.eq.s32.totalorder %v47, 3
    %vm176 = vcmp.eq.s32.totalorder %v50, 3
    %vm177 = vcmp.eq.s32.totalorder %v53, 3
    %vm178 = vcmp.eq.s32.totalorder %v56, 3
    %vm179 = vcmp.eq.s32.totalorder %v59, 3
    %v180 = vsel %vm172, %v20, -inf
    %v181 = vsel %vm173, %v21, -inf
    %v182 = vsel %vm174, %v22, -inf
    %v183 = vsel %vm175, %v23, -inf
    %v184 = vsel %vm176, %v24, -inf
    %v185 = vsel %vm177, %v25, -inf
    %v186 = vsel %vm178, %v26, -inf
    %v187 = vsel %vm179, %v27, -inf
    %v188 = vsel %vm76, %v180, -inf
    %v189 = vsel %vm76, %v181, -inf
    %v190 = vsel %vm76, %v182, -inf
    %v191 = vsel %vm76, %v183, -inf
    %v192 = vsel %vm76, %v184, -inf
    %v193 = vmax.f32 %v188, %v192
    %v194 = vsel %vm76, %v185, -inf
    %v195 = vmax.f32 %v189, %v194
    %v196 = vsel %vm76, %v186, -inf
    %v197 = vmax.f32 %v190, %v196
    %v198 = vsel %vm76, %v187, -inf
    %v199 = vmax.f32 %v191, %v198
    %v200 = vmax.f32 %v193, %v195
    %v201 = vmax.f32 %v197, %v199
    %v202 = vmax.f32 %v200, %v201
    %v203 = vrot.slane %v202, 4
    %v204 = vmax.f32 %v202, %v203
    %v205 = vrot.slane %v204, 2
    %v206 = vmax.f32 %v204, %v205
    %v207 = vrot.slane %v206, 1
    %v208 = vmax.f32 %v206, %v207
    %vm209 = vcmp.eq.s32.totalorder %v38, 4
    %vm210 = vcmp.eq.s32.totalorder %v41, 4
    %vm211 = vcmp.eq.s32.totalorder %v44, 4
    %vm212 = vcmp.eq.s32.totalorder %v47, 4
    %vm213 = vcmp.eq.s32.totalorder %v50, 4
    %vm214 = vcmp.eq.s32.totalorder %v53, 4
    %vm215 = vcmp.eq.s32.totalorder %v56, 4
    %vm216 = vcmp.eq.s32.totalorder %v59, 4
    %v217 = vsel %vm209, %v20, -inf
    %v218 = vsel %vm210, %v21, -inf
    %v219 = vsel %vm211, %v22, -inf
    %v220 = vsel %vm212, %v23, -inf
    %v221 = vsel %vm213, %v24, -inf
    %v222 = vsel %vm214, %v25, -inf
    %v223 = vsel %vm215, %v26, -inf
    %v224 = vsel %vm216, %v27, -inf
    %v225 = vsel %vm76, %v217, -inf
    %v226 = vsel %vm76, %v218, -inf
    %v227 = vsel %vm76, %v219, -inf
    %v228 = vsel %vm76, %v220, -inf
    %v229 = vsel %vm76, %v221, -inf
    %v230 = vmax.f32 %v225, %v229
    %v231 = vsel %vm76, %v222, -inf
    %v232 = vmax.f32 %v226, %v231
    %v233 = vsel %vm76, %v223, -inf
    %v234 = vmax.f32 %v227, %v233
    %v235 = vsel %vm76, %v224, -inf
    %v236 = vmax.f32 %v228, %v235
    %v237 = vmax.f32 %v230, %v232
    %v238 = vmax.f32 %v234, %v236
    %v239 = vmax.f32 %v237, %v238
    %v240 = vrot.slane %v239, 4
    %v241 = vmax.f32 %v239, %v240
    %v242 = vrot.slane %v241, 2
    %v243 = vmax.f32 %v241, %v242
    %v244 = vrot.slane %v243, 1
    %v245 = vmax.f32 %v243, %v244
    %vm246 = vcmp.eq.s32.totalorder %v38, 5
    %vm247 = vcmp.eq.s32.totalorder %v41, 5
    %vm248 = vcmp.eq.s32.totalorder %v44, 5
    %vm249 = vcmp.eq.s32.totalorder %v47, 5
    %vm250 = vcmp.eq.s32.totalorder %v50, 5
    %vm251 = vcmp.eq.s32.totalorder %v53, 5
    %vm252 = vcmp.eq.s32.totalorder %v56, 5
    %vm253 = vcmp.eq.s32.totalorder %v59, 5
    %v254 = vsel %vm246, %v20, -inf
    %v255 = vsel %vm247, %v21, -inf
    %v256 = vsel %vm248, %v22, -inf
    %v257 = vsel %vm249, %v23, -inf
    %v258 = vsel %vm250, %v24, -inf
    %v259 = vsel %vm251, %v25, -inf
    %v260 = vsel %vm252, %v26, -inf
    %v261 = vsel %vm253, %v27, -inf
    %v262 = vsel %vm76, %v254, -inf
    %v263 = vsel %vm76, %v255, -inf
    %v264 = vsel %vm76, %v256, -inf
    %v265 = vsel %vm76, %v257, -inf
    %v266 = vsel %vm76, %v258, -inf
    %v267 = vmax.f32 %v262, %v266
    %v268 = vsel %vm76, %v259, -inf
    %v269 = vmax.f32 %v263, %v268
    %v270 = vsel %vm76, %v260, -inf
    %v271 = vmax.f32 %v264, %v270
    %v272 = vsel %vm76, %v261, -inf
    %v273 = vmax.f32 %v265, %v272
    %v274 = vmax.f32 %v267, %v269
    %v275 = vmax.f32 %v271, %v273
    %v276 = vmax.f32 %v274, %v275
    %v277 = vrot.slane %v276, 4
    %v278 = vmax.f32 %v276, %v277
    %v279 = vrot.slane %v278, 2
    %v280 = vmax.f32 %v278, %v279
    %v281 = vrot.slane %v280, 1
    %v282 = vmax.f32 %v280, %v281
    %vm283 = vcmp.eq.s32.totalorder %v38, 6
    %vm284 = vcmp.eq.s32.totalorder %v41, 6
    %vm285 = vcmp.eq.s32.totalorder %v44, 6
    %vm286 = vcmp.eq.s32.totalorder %v47, 6
    %vm287 = vcmp.eq.s32.totalorder %v50, 6
    %vm288 = vcmp.eq.s32.totalorder %v53, 6
    %vm289 = vcmp.eq.s32.totalorder %v56, 6
    %vm290 = vcmp.eq.s32.totalorder %v59, 6
    %v291 = vsel %vm283, %v20, -inf
    %v292 = vsel %vm284, %v21, -inf
    %v293 = vsel %vm285, %v22, -inf
    %v294 = vsel %vm286, %v23, -inf
    %v295 = vsel %vm287, %v24, -inf
    %v296 = vsel %vm288, %v25, -inf
    %v297 = vsel %vm289, %v26, -inf
    %v298 = vsel %vm290, %v27, -inf
    %v299 = vsel %vm76, %v291, -inf
    %v300 = vsel %vm76, %v292, -inf
    %v301 = vsel %vm76, %v293, -inf
    %v302 = vsel %vm76, %v294, -inf
    %v303 = vsel %vm76, %v295, -inf
    %v304 = vmax.f32 %v299, %v303
    %v305 = vsel %vm76, %v296, -inf
    %v306 = vmax.f32 %v300, %v305
    %v307 = vsel %vm76, %v297, -inf
    %v308 = vmax.f32 %v301, %v307
    %v309 = vsel %vm76, %v298, -inf
    %v310 = vmax.f32 %v302, %v309
    %v311 = vmax.f32 %v304, %v306
    %v312 = vmax.f32 %v308, %v310
    %v313 = vmax.f32 %v311, %v312
    %v314 = vrot.slane %v313, 4
    %v315 = vmax.f32 %v313, %v314
    %v316 = vrot.slane %v315, 2
    %v317 = vmax.f32 %v315, %v316
    %v318 = vrot.slane %v317, 1
    %v319 = vmax.f32 %v317, %v318
    %vm320 = vcmp.eq.s32.totalorder %v38, 7
    %vm321 = vcmp.eq.s32.totalorder %v41, 7
    %vm322 = vcmp.eq.s32.totalorder %v44, 7
    %vm323 = vcmp.eq.s32.totalorder %v47, 7
    %vm324 = vcmp.eq.s32.totalorder %v50, 7
    %vm325 = vcmp.eq.s32.totalorder %v53, 7
    %vm326 = vcmp.eq.s32.totalorder %v56, 7
    %vm327 = vcmp.eq.s32.totalorder %v59, 7
    %v328 = vsel %vm320, %v20, -inf
    %v329 = vsel %vm321, %v21, -inf
    %v330 = vsel %vm322, %v22, -inf
    %v331 = vsel %vm323, %v23, -inf
    %v332 = vsel %vm324, %v24, -inf
    %v333 = vsel %vm325, %v25, -inf
    %v334 = vsel %vm326, %v26, -inf
    %v335 = vsel %vm327, %v27, -inf
    %v336 = vsel %vm76, %v328, -inf
    %v337 = vsel %vm76, %v329, -inf
    %v338 = vsel %vm76, %v330, -inf
    %v339 = vsel %vm76, %v331, -inf
    %v340 = vsel %vm76, %v332, -inf
    %v341 = vmax.f32 %v336, %v340
    %v342 = vsel %vm76, %v333, -inf
    %v343 = vmax.f32 %v337, %v342
    %v344 = vsel %vm76, %v334, -inf
    %v345 = vmax.f32 %v338, %v344
    %v346 = vsel %vm76, %v335, -inf
    %v347 = vmax.f32 %v339, %v346
    %v348 = vmax.f32 %v341, %v343
    %v349 = vmax.f32 %v345, %v347
    %v350 = vmax.f32 %v348, %v349
    %v351 = vrot.slane %v350, 4
    %v352 = vmax.f32 %v350, %v351
    %v353 = vrot.slane %v352, 2
    %v354 = vmax.f32 %v352, %v353
    %v355 = vrot.slane %v354, 1
    %v356 = vmax.f32 %v354, %v355
    %vm357 = vcmask 1040384
    %v358 = vsel %vm357, %v97, %v134
    %vm359 = vcmask 1041408
    %v360 = vsel %vm359, %v358, %v171
    %vm361 = vcmask 1042432
    %v362 = vsel %vm361, %v360, %v208
    %vm363 = vcmask 1043456
    %v364 = vsel %vm363, %v362, %v245
    %vm365 = vcmask 1044480
    %v366 = vsel %vm365, %v364, %v282
    %vm367 = vcmask 1045504
    %v368 = vsel %vm367, %v366, %v319
    %vm369 = vcmask 1046528
    %v370 = vsel %vm369, %v368, %v356
    %v371 = vld [vmem:[#allocation3] sm:$0xff]
    %v372 = vmax.f32 %v371, %v370
    %373 = vst.msk [vmem:[#allocation3] sm:$0xff] %vm76, %v372
    %v374 = vlaneseq
    %v375 = vand.u32 %v374, 127
    %vm376 = vcmp.eq.s32.totalorder %v38, %v375
    %vm377 = vcmp.eq.s32.totalorder %v41, %v375
    %vm378 = vcmp.eq.s32.totalorder %v44, %v375
    %vm379 = vcmp.eq.s32.totalorder %v47, %v375
    %vm380 = vcmp.eq.s32.totalorder %v50, %v375
    %vm381 = vcmp.eq.s32.totalorder %v53, %v375
    %vm382 = vcmp.eq.s32.totalorder %v56, %v375
    %vm383 = vcmp.eq.s32.totalorder %v59, %v375
    %v384 = vld [vmem:[#allocation2] sm:$0x1]
    %v385 = vsel %vm376, 1, 0
    %v386 = vsel %vm377, 1, 0
    %v387 = vsel %vm378, 1, 0
    %v388 = vsel %vm379, 1, 0
    %v389 = vsel %vm380, 1, 0
    %v390 = vsel %vm381, 1, 0
    %v391 = vsel %vm382, 1, 0
    %v392 = vsel %vm383, 1, 0
    %v393 = vcvt.s32.f32 %v385
    %v394 = vcvt.s32.f32 %v386
    %v395 = vcvt.s32.f32 %v387
    %v396 = vcvt.s32.f32 %v388
    %v397 = vcvt.s32.f32 %v389
    %v398 = vcvt.s32.f32 %v390
    %v399 = vcvt.s32.f32 %v391
    %v400 = vcvt.s32.f32 %v392
    %vm401 = vcmask 64512
    %v402 = vsel %vm401, %v393, -inf
    %v403 = vsel %vm401, %v394, -inf
    %v404 = vsel %vm401, %v395, -inf
    %v405 = vsel %vm401, %v396, -inf
    %v406 = vsel %vm401, %v397, -inf
    %v407 = vmax.f32 %v402, %v406
    %v408 = vsel %vm401, %v398, -inf
    %v409 = vmax.f32 %v403, %v408
    %v410 = vsel %vm401, %v399, -inf
    %v411 = vmax.f32 %v404, %v410
    %v412 = vsel %vm401, %v400, -inf
    %v413 = vmax.f32 %v405, %v412
    %v414 = vmax.f32 %v407, %v409
    %v415 = vmax.f32 %v411, %v413
    %v416 = vmax.f32 %v414, %v415
    %v417 = vrot.slane %v416, 4
    %v418 = vmax.f32 %v416, %v417
    %v419 = vrot.slane %v418, 2
    %v420 = vmax.f32 %v418, %v419
    %v421 = vrot.slane %v420, 1
    %v422 = vmax.f32 %v420, %v421
    %v423 = vmax.f32 %v384, %v422
    %vm424 = vcmask 57344
    %425 = vst.msk [vmem:[#allocation2] sm:$0x1] %vm424, %v423
    // Predicated region
    $region14: #{tpu_custom_call.1} parent=1 // pred_check
      %p426 = pneg %p12
    $region15: #{tpu_custom_call.1} parent=1 // pred_check_branch
      %428 = sbr.rel (%p426) target = $region17
    $region16: #{tpu_custom_call.1} parent=1 // pred_region
      %v429 = vld [vmem:[#allocation2] sm:$0x1]
      %v430 = vlaneseq
      %v431 = vshrl.u32 %v430, 7
      %vm432 = vcmp.eq.s32.totalorder %v431, %v375
      %v434 = vlaneseq
      %v435 = vshrl.u32 %v434, 7
      %v436 = vsub.s32 0, %v435
      %v437 = vrot.slane %v429, %v436
      %v439 = vsel %vm432, %v437, 0.0
      %v440 = vsel %vm401, %v439, -inf
      %441 = vmax.xlane.f32.xlu0 %v440
      %v442 = vpop.xlane.xlu0 %441
      %vm443 = vcmp.gt.f32.partialorder %v442, 0.0
      %v444 = vld [vmem:[#allocation3] sm:$0xff]
      %v445 = vsel %vm443, 1, 0
      %vm446 = vcmp.eq.s32.totalorder %v445, 1
      %v447 = vsel %vm446, %v444, 0.0
      %448 = vst.msk [vmem:[#allocation3] sm:$0xff] %vm76, %v447
    $region17: #{tpu_custom_call.1} parent=1 // pred_fallthru
      _
    // Predicated region
    $region18: #{tpu_custom_call.1} parent=1 // pred_check
      _
    $region19: #{tpu_custom_call.1} parent=1 // pred_check_branch
      %450 = sbr.rel (0) target = $region21
    $region20: #{tpu_custom_call.1} parent=1 // pred_region
      %s452 = ssub.s32 128, 128
      %453 = vsyncadd [#allocation4], %s452
      %s455 = sshll.u32 [#allocation3], 4
      %s456 = int_to_ptr.vmem [resolvable:$true] %s455
      %458 = dma.vmem_to_hbm [thread:$0]  %s456, 128, %s2, [#allocation4]
    $region21: #{tpu_custom_call.1} parent=1 // pred_fallthru
      _
    // Predicated region
    $region22: #{tpu_custom_call.1} parent=1 // pred_check
      _
    $region23: #{tpu_custom_call.1} parent=1 // pred_check_branch
      %460 = sbr.rel (0) target = $region25
    $region24: #{tpu_custom_call.1} parent=1 // pred_region
      %461 = dma.done [#allocation4], 128
    $region25: #{tpu_custom_call.1} parent=1 // pred_fallthru
      _
    %462 = vsyncpa [#allocation4], 1

</llo_original>
